<compile_context>
chip_gen: v6e
topology: v6e:2x2x1
jax: 0.10.0
libtpu: 0.0.40
codegen_flags: <defaults>
</compile_context>

<pallas_src>
import functools

import jax
import jax.numpy as jnp
from jax import lax
from jax.experimental import pallas as pl
from jax.experimental.pallas import tpu as pltpu

C_PAD = 128        # lane-dense logits slab width (output last dim)
K_FUSE_MAX = 2048  # collapse the whole L axis when L*D <= this
K_TARGET = 256     # per-grid-step MXU contraction target when tiling L


def _round_up(x, m):
    return -(-x // m) * m


def _choose_tl(seq_len, dim):
    """How many token positions (TL) are fused per grid step, and #steps (nls)."""
    if seq_len * dim <= K_FUSE_MAX:
        return seq_len, 1                       # collapse L entirely (demo path)
    tl = -(-K_TARGET // dim)                    # K = TL*D >= 256
    while (tl * dim) % 8 != 0:                  # weight-block sublane constraint
        tl += 1
    nls = -(-seq_len // tl)
    return tl, nls


def _clf_kernel(ids_ref,   # VMEM (1, TB, TL) int32 token ids for this grid step
                emb_ref,   # VMEM (V, D) bf16 embedding table (resident)
                w_ref,     # VMEM (TL*D, C_PAD) bf16 classifier weight slice
                b_ref,     # VMEM (1, C_PAD) f32 bias (resident)
                o_ref,     # VMEM (TB, C_PAD) f32 output block (resident over l)
                xg_ref,    # VMEM scratch (TB, TL*D) bf16 gathered embeddings
                *, tl, nls):
    v, d = emb_ref.shape
    tb = o_ref.shape[0]
    l = pl.program_id(1)

    emb = emb_ref[...]                                        # (V, D) bf16
    ids_blk = ids_ref[0]                                      # (TB, TL) int32
    lane_iota = lax.broadcasted_iota(jnp.int32, (tb, v), 1)   # hoisted out of loop

    # One-hot MXU gather: xg[:, t*D:(t+1)*D] = onehot(ids[:, t]) @ emb.
    # (Exact: one-hot rows select bf16 embedding rows; f32 accumulate.)
    for t in range(tl):                                       # static unroll
        oh = (ids_blk[:, t:t + 1] == lane_iota).astype(emb.dtype)   # (TB, V) bf16
        xg_ref[:, pl.ds(t * d, d)] = jnp.dot(
            oh, emb, preferred_element_type=jnp.float32).astype(xg_ref.dtype)

    # Fused classifier matmul over TL token positions: K = TL*D on the MXU.
    part = jnp.dot(xg_ref[...], w_ref[...], preferred_element_type=jnp.float32)

    if nls == 1:
        # Small-model path: single pass, write output directly (no accumulator).
        o_ref[...] = part + b_ref[...]
    else:
        # o_ref doubles as the f32 accumulator (constant block index over l).
        @pl.when(l == 0)
        def _():
            o_ref[...] = jnp.broadcast_to(b_ref[...], o_ref.shape)

        o_ref[...] += part


def prepare_clf_params(emb_table, w, b, fix_length, dim_embedding, c_pad=C_PAD):
    """One-time parameter prep (do NOT call per forward).

    * embedding table -> bfloat16 (MXU input dtype, halves DMA/VMEM bytes)
    * nn.Linear weight (C, L*D) -> (L_pad*D, c_pad) bf16, matching row-major
      flatten of the (B, L, D) embedding output; zero-padded rows/classes.
    * bias -> (1, c_pad) f32 (added after f32 accumulation).
    """
    num_classes, f = w.shape
    assert f == fix_length * dim_embedding
    tl, nls = _choose_tl(fix_length, dim_embedding)
    l_pad = tl * nls
    w2 = w.reshape(num_classes, fix_length, dim_embedding)       # (C, L, D)
    w2 = jnp.transpose(w2, (1, 2, 0)).reshape(f, num_classes)    # (L*D, C)
    w2 = jnp.pad(w2, ((0, (l_pad - fix_length) * dim_embedding),
                      (0, c_pad - num_classes)))
    b_pad = jnp.pad(b, (0, c_pad - num_classes)).reshape(1, c_pad)
    return (emb_table.astype(jnp.bfloat16),
            w2.astype(jnp.bfloat16),
            b_pad.astype(jnp.float32))


@functools.partial(jax.jit, static_argnames=("num_classes", "tb"))
def naive_clf_forward(x_ids, emb_table, w2, b_pad, *, num_classes=2, tb=None):
    """Forward pass of Naive_Clf (eval mode).

    x_ids:     (B, L) int token ids
    emb_table: (V, D) bf16 embedding table (from prepare_clf_params)
    w2:        (L_pad*D, C_PAD) bf16 prepared classifier weight
    b_pad:     (1, C_PAD) f32 prepared bias
    returns    (B, num_classes) f32 logits
    """
    B, L = x_ids.shape
    V, D = emb_table.shape
    c_pad = b_pad.shape[-1]
    tl, nls = _choose_tl(L, D)
    l_pad = tl * nls
    assert w2.shape == (l_pad * D, c_pad)

    # Batch tile: multiple of 8 sublanes, cap 1024; when B is big enough prefer
    # >= 2 tiles so the "parallel" batch axis can split across v7x's 2 TCs.
    if tb is None:
        b8 = _round_up(B, 8)
        tb = 8 if b8 <= 8 else min(1024, _round_up(-(-b8 // 2), 8))
    nbt = -(-B // tb)
    b_padded = nbt * tb

    ids = x_ids.astype(jnp.int32)
    ids = jnp.pad(ids, ((0, b_padded - B), (0, l_pad - L)))   # pad rows/cols with token 0
    # (nls, B_pad, TL): per-grid-step id block, statically indexable in-kernel.
    ids3 = jnp.transpose(ids.reshape(b_padded, nls, tl), (1, 0, 2))

    # Explicit VMEM budget: resident table + double-buffered streamed blocks + scratch.
    need = (2 * (V * D * emb_table.dtype.itemsize
                 + tl * D * c_pad * w2.dtype.itemsize
                 + c_pad * 4
                 + tb * tl * 4
                 + tb * c_pad * 4)
            + tb * tl * D * 2
            + (4 << 20))
    vmem_limit = int(min(max(need, 32 << 20), 128 << 20))

    grid_spec = pltpu.PrefetchScalarGridSpec(
        num_scalar_prefetch=0,
        grid=(nbt, nls),                 # batch tiles (parallel) x fused-token steps (reduction)
        in_specs=[
            # ids block for this (batch tile, l) step.
            pl.BlockSpec((1, tb, tl), lambda i, l: (l, i, 0)),
            # Whole embedding table, VMEM-resident across the grid.
            pl.BlockSpec((V, D), lambda i, l: (0, 0)),
            # Weight slice for the TL fused token positions (streams over l).
            pl.BlockSpec((tl * D, c_pad), lambda i, l: (l, 0)),
            # Bias, resident.
            pl.BlockSpec((1, c_pad), lambda i, l: (0, 0)),
        ],
        # Lane-dense output slab; constant block index over l -> accumulator-resident.
        out_specs=pl.BlockSpec((tb, c_pad), lambda i, l: (i, 0)),
        scratch_shapes=[
            pltpu.VMEM((tb, tl * D), jnp.bfloat16),   # gathered embeddings (bf16, exact)
        ],
    )

    out = pl.pallas_call(
        functools.partial(_clf_kernel, tl=tl, nls=nls),
        out_shape=jax.ShapeDtypeStruct((b_padded, c_pad), jnp.float32),
        grid_spec=grid_spec,
        compiler_params=pltpu.CompilerParams(
            dimension_semantics=("parallel", "arbitrary"),
            vmem_limit_bytes=vmem_limit,
        ),
    )(ids3, emb_table, w2, b_pad)

    return out[:B, :num_classes]


if __name__ == "__main__":
    # Small, module-consistent shapes.
    vocab_size = 32
    dim_embedding = 16
    fix_length = 8           # sequence length (fix_length in the module)
    num_classes = 2          # the module hard-codes Linear(..., 2)
    batch = 2

    key = jax.random.PRNGKey(0)
    k_emb, k_w, k_b, k_x = jax.random.split(key, 4)

    # Deterministic parameter init (shapes from the module __init__).
    emb_table = jax.random.normal(k_emb, (vocab_size, dim_embedding), dtype=jnp.float32)
    fan_in = dim_embedding * fix_length
    bound = 1.0 / jnp.sqrt(fan_in)
    w = jax.random.uniform(k_w, (num_classes, fan_in), minval=-bound, maxval=bound,
                           dtype=jnp.float32)
    b = jax.random.uniform(k_b, (num_classes,), minval=-bound, maxval=bound,
                           dtype=jnp.float32)

    x_ids = jax.random.randint(k_x, (batch, fix_length), 0, vocab_size, dtype=jnp.int32)

    # One-time parameter preparation (bf16 table/weights, padded bias).
    emb_bf, w2, b_pad = prepare_clf_params(emb_table, w, b, fix_length, dim_embedding)

    out = naive_clf_forward(x_ids, emb_bf, w2, b_pad, num_classes=num_classes)
    out = jax.block_until_ready(out)

    # Reference in plain JAX (same math as the PyTorch module in eval mode),
    # using the same bf16-rounded parameters the kernel consumes.
    emb_r = emb_table.astype(jnp.bfloat16).astype(jnp.float32)
    w_r = w.astype(jnp.bfloat16).astype(jnp.float32)
    ref = jnp.take(emb_r, x_ids, axis=0).reshape(batch, -1) @ w_r.T + b
    assert out.shape == (batch, num_classes)
    assert jnp.allclose(out, ref, atol=1e-4, rtol=1e-4), float(jnp.max(jnp.abs(out - ref)))

    print("KERNEL_OK")
</pallas_src>

<mosaic_0001>
module attributes {stable_mosaic.version = 11 : i64} {
  func.func @_clf_kernel(%arg0: i32, %arg1: i32, %arg2: memref<1x8x8xi32, #tpu.memory_space<vmem>>, %arg3: memref<32x16xbf16, #tpu.memory_space<vmem>>, %arg4: memref<128x128xbf16, #tpu.memory_space<vmem>>, %arg5: memref<1x128xf32, #tpu.memory_space<vmem>>, %arg6: memref<8x128xf32, #tpu.memory_space<vmem>>, %arg7: memref<8x128xbf16, #tpu.memory_space<vmem>>) attributes {dimension_semantics = [#tpu.dimension_semantics<parallel>, #tpu.dimension_semantics<arbitrary>], iteration_bounds = array<i64: 1, 1>, scalar_prefetch = 0 : i64, scratch_operands = 1 : i64, tpu.core_type = #tpu.core_type<tc>, window_params = [{transform_indices = @transform_0, window_bounds = array<i64: 1, 8, 8>}, {pipeline_mode = #tpu.pipeline_mode<synchronous>, transform_indices = @transform_1, window_bounds = array<i64: 32, 16>}, {transform_indices = @transform_2, window_bounds = array<i64: 128, 128>}, {pipeline_mode = #tpu.pipeline_mode<synchronous>, transform_indices = @transform_3, window_bounds = array<i64: 1, 128>}, {transform_indices = @transform_4, window_bounds = array<i64: 8, 128>}]} {
    %c0 = arith.constant 0 : index
    %c0_0 = arith.constant 0 : index
    %0 = vector.load %arg3[%c0, %c0_0] : memref<32x16xbf16, #tpu.memory_space<vmem>>, vector<32x16xbf16>
    %c0_1 = arith.constant 0 : index
    %c0_2 = arith.constant 0 : index
    %c0_3 = arith.constant 0 : index
    %1 = vector.load %arg2[%c0_1, %c0_2, %c0_3] : memref<1x8x8xi32, #tpu.memory_space<vmem>>, vector<1x8x8xi32>
    %2 = vector.shape_cast %1 : vector<1x8x8xi32> to vector<8x8xi32>
    %3 = tpu.iota {dimensions = array<i32: 1>} : vector<8x32xi32>
    %4 = vector.extract_strided_slice %2 {offsets = [0, 0], sizes = [8, 1], strides = [1, 1]} : vector<8x8xi32> to vector<8x1xi32>
    %5 = vector.broadcast %4 : vector<8x1xi32> to vector<8x32xi32>
    %6 = arith.cmpi eq, %5, %3 : vector<8x32xi32>
    %7 = arith.extui %6 : vector<8x32xi1> to vector<8x32xi32>
    %8 = arith.sitofp %7 : vector<8x32xi32> to vector<8x32xf32>
    %9 = arith.truncf %8 : vector<8x32xf32> to vector<8x32xbf16>
    %cst = arith.constant dense<0.000000e+00> : vector<8x16xf32>
    %10 = tpu.matmul %9, %0, %cst {dimension_numbers = #tpu.dot_dimension_numbers<[1], [0], [0], [1], [0, 0, 1, 1], [], []>} : vector<8x32xbf16>, vector<32x16xbf16>, vector<8x16xf32> -> vector<8x16xf32>
    %11 = arith.truncf %10 : vector<8x16xf32> to vector<8x16xbf16>
    %c0_4 = arith.constant 0 : index
    %c0_5 = arith.constant 0 : index
    %12 = vector.load %arg7[%c0_4, %c0_5] : memref<8x128xbf16, #tpu.memory_space<vmem>>, vector<8x16xbf16>
    tpu.vector_store %arg7[%c0_4, %c0_5], %11 {strides = array<i32>} : memref<8x128xbf16, #tpu.memory_space<vmem>>, vector<8x16xbf16>,
    %13 = vector.extract_strided_slice %2 {offsets = [0, 1], sizes = [8, 1], strides = [1, 1]} : vector<8x8xi32> to vector<8x1xi32>
    %14 = vector.broadcast %13 : vector<8x1xi32> to vector<8x32xi32>
    %15 = arith.cmpi eq, %14, %3 : vector<8x32xi32>
    %16 = arith.extui %15 : vector<8x32xi1> to vector<8x32xi32>
    %17 = arith.sitofp %16 : vector<8x32xi32> to vector<8x32xf32>
    %18 = arith.truncf %17 : vector<8x32xf32> to vector<8x32xbf16>
    %cst_6 = arith.constant dense<0.000000e+00> : vector<8x16xf32>
    %19 = tpu.matmul %18, %0, %cst_6 {dimension_numbers = #tpu.dot_dimension_numbers<[1], [0], [0], [1], [0, 0, 1, 1], [], []>} : vector<8x32xbf16>, vector<32x16xbf16>, vector<8x16xf32> -> vector<8x16xf32>
    %20 = arith.truncf %19 : vector<8x16xf32> to vector<8x16xbf16>
    %c0_7 = arith.constant 0 : index
    %c16 = arith.constant 16 : index
    %21 = vector.load %arg7[%c0_7, %c16] : memref<8x128xbf16, #tpu.memory_space<vmem>>, vector<8x16xbf16>
    tpu.vector_store %arg7[%c0_7, %c16], %20 {strides = array<i32>} : memref<8x128xbf16, #tpu.memory_space<vmem>>, vector<8x16xbf16>,
    %22 = vector.extract_strided_slice %2 {offsets = [0, 2], sizes = [8, 1], strides = [1, 1]} : vector<8x8xi32> to vector<8x1xi32>
    %23 = vector.broadcast %22 : vector<8x1xi32> to vector<8x32xi32>
    %24 = arith.cmpi eq, %23, %3 : vector<8x32xi32>
    %25 = arith.extui %24 : vector<8x32xi1> to vector<8x32xi32>
    %26 = arith.sitofp %25 : vector<8x32xi32> to vector<8x32xf32>
    %27 = arith.truncf %26 : vector<8x32xf32> to vector<8x32xbf16>
    %cst_8 = arith.constant dense<0.000000e+00> : vector<8x16xf32>
    %28 = tpu.matmul %27, %0, %cst_8 {dimension_numbers = #tpu.dot_dimension_numbers<[1], [0], [0], [1], [0, 0, 1, 1], [], []>} : vector<8x32xbf16>, vector<32x16xbf16>, vector<8x16xf32> -> vector<8x16xf32>
    %29 = arith.truncf %28 : vector<8x16xf32> to vector<8x16xbf16>
    %c0_9 = arith.constant 0 : index
    %c32 = arith.constant 32 : index
    %30 = vector.load %arg7[%c0_9, %c32] : memref<8x128xbf16, #tpu.memory_space<vmem>>, vector<8x16xbf16>
    tpu.vector_store %arg7[%c0_9, %c32], %29 {strides = array<i32>} : memref<8x128xbf16, #tpu.memory_space<vmem>>, vector<8x16xbf16>,
    %31 = vector.extract_strided_slice %2 {offsets = [0, 3], sizes = [8, 1], strides = [1, 1]} : vector<8x8xi32> to vector<8x1xi32>
    %32 = vector.broadcast %31 : vector<8x1xi32> to vector<8x32xi32>
    %33 = arith.cmpi eq, %32, %3 : vector<8x32xi32>
    %34 = arith.extui %33 : vector<8x32xi1> to vector<8x32xi32>
    %35 = arith.sitofp %34 : vector<8x32xi32> to vector<8x32xf32>
    %36 = arith.truncf %35 : vector<8x32xf32> to vector<8x32xbf16>
    %cst_10 = arith.constant dense<0.000000e+00> : vector<8x16xf32>
    %37 = tpu.matmul %36, %0, %cst_10 {dimension_numbers = #tpu.dot_dimension_numbers<[1], [0], [0], [1], [0, 0, 1, 1], [], []>} : vector<8x32xbf16>, vector<32x16xbf16>, vector<8x16xf32> -> vector<8x16xf32>
    %38 = arith.truncf %37 : vector<8x16xf32> to vector<8x16xbf16>
    %c0_11 = arith.constant 0 : index
    %c48 = arith.constant 48 : index
    %39 = vector.load %arg7[%c0_11, %c48] : memref<8x128xbf16, #tpu.memory_space<vmem>>, vector<8x16xbf16>
    tpu.vector_store %arg7[%c0_11, %c48], %38 {strides = array<i32>} : memref<8x128xbf16, #tpu.memory_space<vmem>>, vector<8x16xbf16>,
    %40 = vector.extract_strided_slice %2 {offsets = [0, 4], sizes = [8, 1], strides = [1, 1]} : vector<8x8xi32> to vector<8x1xi32>
    %41 = vector.broadcast %40 : vector<8x1xi32> to vector<8x32xi32>
    %42 = arith.cmpi eq, %41, %3 : vector<8x32xi32>
    %43 = arith.extui %42 : vector<8x32xi1> to vector<8x32xi32>
    %44 = arith.sitofp %43 : vector<8x32xi32> to vector<8x32xf32>
    %45 = arith.truncf %44 : vector<8x32xf32> to vector<8x32xbf16>
    %cst_12 = arith.constant dense<0.000000e+00> : vector<8x16xf32>
    %46 = tpu.matmul %45, %0, %cst_12 {dimension_numbers = #tpu.dot_dimension_numbers<[1], [0], [0], [1], [0, 0, 1, 1], [], []>} : vector<8x32xbf16>, vector<32x16xbf16>, vector<8x16xf32> -> vector<8x16xf32>
    %47 = arith.truncf %46 : vector<8x16xf32> to vector<8x16xbf16>
    %c0_13 = arith.constant 0 : index
    %c64 = arith.constant 64 : index
    %48 = vector.load %arg7[%c0_13, %c64] : memref<8x128xbf16, #tpu.memory_space<vmem>>, vector<8x16xbf16>
    tpu.vector_store %arg7[%c0_13, %c64], %47 {strides = array<i32>} : memref<8x128xbf16, #tpu.memory_space<vmem>>, vector<8x16xbf16>,
    %49 = vector.extract_strided_slice %2 {offsets = [0, 5], sizes = [8, 1], strides = [1, 1]} : vector<8x8xi32> to vector<8x1xi32>
    %50 = vector.broadcast %49 : vector<8x1xi32> to vector<8x32xi32>
    %51 = arith.cmpi eq, %50, %3 : vector<8x32xi32>
    %52 = arith.extui %51 : vector<8x32xi1> to vector<8x32xi32>
    %53 = arith.sitofp %52 : vector<8x32xi32> to vector<8x32xf32>
    %54 = arith.truncf %53 : vector<8x32xf32> to vector<8x32xbf16>
    %cst_14 = arith.constant dense<0.000000e+00> : vector<8x16xf32>
    %55 = tpu.matmul %54, %0, %cst_14 {dimension_numbers = #tpu.dot_dimension_numbers<[1], [0], [0], [1], [0, 0, 1, 1], [], []>} : vector<8x32xbf16>, vector<32x16xbf16>, vector<8x16xf32> -> vector<8x16xf32>
    %56 = arith.truncf %55 : vector<8x16xf32> to vector<8x16xbf16>
    %c0_15 = arith.constant 0 : index
    %c80 = arith.constant 80 : index
    %57 = vector.load %arg7[%c0_15, %c80] : memref<8x128xbf16, #tpu.memory_space<vmem>>, vector<8x16xbf16>
    tpu.vector_store %arg7[%c0_15, %c80], %56 {strides = array<i32>} : memref<8x128xbf16, #tpu.memory_space<vmem>>, vector<8x16xbf16>,
    %58 = vector.extract_strided_slice %2 {offsets = [0, 6], sizes = [8, 1], strides = [1, 1]} : vector<8x8xi32> to vector<8x1xi32>
    %59 = vector.broadcast %58 : vector<8x1xi32> to vector<8x32xi32>
    %60 = arith.cmpi eq, %59, %3 : vector<8x32xi32>
    %61 = arith.extui %60 : vector<8x32xi1> to vector<8x32xi32>
    %62 = arith.sitofp %61 : vector<8x32xi32> to vector<8x32xf32>
    %63 = arith.truncf %62 : vector<8x32xf32> to vector<8x32xbf16>
    %cst_16 = arith.constant dense<0.000000e+00> : vector<8x16xf32>
    %64 = tpu.matmul %63, %0, %cst_16 {dimension_numbers = #tpu.dot_dimension_numbers<[1], [0], [0], [1], [0, 0, 1, 1], [], []>} : vector<8x32xbf16>, vector<32x16xbf16>, vector<8x16xf32> -> vector<8x16xf32>
    %65 = arith.truncf %64 : vector<8x16xf32> to vector<8x16xbf16>
    %c0_17 = arith.constant 0 : index
    %c96 = arith.constant 96 : index
    %66 = vector.load %arg7[%c0_17, %c96] : memref<8x128xbf16, #tpu.memory_space<vmem>>, vector<8x16xbf16>
    tpu.vector_store %arg7[%c0_17, %c96], %65 {strides = array<i32>} : memref<8x128xbf16, #tpu.memory_space<vmem>>, vector<8x16xbf16>,
    %67 = vector.extract_strided_slice %2 {offsets = [0, 7], sizes = [8, 1], strides = [1, 1]} : vector<8x8xi32> to vector<8x1xi32>
    %68 = vector.broadcast %67 : vector<8x1xi32> to vector<8x32xi32>
    %69 = arith.cmpi eq, %68, %3 : vector<8x32xi32>
    %70 = arith.extui %69 : vector<8x32xi1> to vector<8x32xi32>
    %71 = arith.sitofp %70 : vector<8x32xi32> to vector<8x32xf32>
    %72 = arith.truncf %71 : vector<8x32xf32> to vector<8x32xbf16>
    %cst_18 = arith.constant dense<0.000000e+00> : vector<8x16xf32>
    %73 = tpu.matmul %72, %0, %cst_18 {dimension_numbers = #tpu.dot_dimension_numbers<[1], [0], [0], [1], [0, 0, 1, 1], [], []>} : vector<8x32xbf16>, vector<32x16xbf16>, vector<8x16xf32> -> vector<8x16xf32>
    %74 = arith.truncf %73 : vector<8x16xf32> to vector<8x16xbf16>
    %c0_19 = arith.constant 0 : index
    %c112 = arith.constant 112 : index
    %75 = vector.load %arg7[%c0_19, %c112] : memref<8x128xbf16, #tpu.memory_space<vmem>>, vector<8x16xbf16>
    tpu.vector_store %arg7[%c0_19, %c112], %74 {strides = array<i32>} : memref<8x128xbf16, #tpu.memory_space<vmem>>, vector<8x16xbf16>,
    %c0_20 = arith.constant 0 : index
    %c0_21 = arith.constant 0 : index
    %76 = vector.load %arg7[%c0_20, %c0_21] : memref<8x128xbf16, #tpu.memory_space<vmem>>, vector<8x128xbf16>
    %c0_22 = arith.constant 0 : index
    %c0_23 = arith.constant 0 : index
    %77 = vector.load %arg4[%c0_22, %c0_23] : memref<128x128xbf16, #tpu.memory_space<vmem>>, vector<128x128xbf16>
    %cst_24 = arith.constant dense<0.000000e+00> : vector<8x128xf32>
    %78 = tpu.matmul %76, %77, %cst_24 {dimension_numbers = #tpu.dot_dimension_numbers<[1], [0], [0], [1], [0, 0, 1, 1], [], []>} : vector<8x128xbf16>, vector<128x128xbf16>, vector<8x128xf32> -> vector<8x128xf32>
    %c0_25 = arith.constant 0 : index
    %c0_26 = arith.constant 0 : index
    %79 = vector.load %arg5[%c0_25, %c0_26] : memref<1x128xf32, #tpu.memory_space<vmem>>, vector<1x128xf32>
    %80 = vector.broadcast %79 : vector<1x128xf32> to vector<8x128xf32>
    %81 = arith.addf %78, %80 : vector<8x128xf32>
    %c0_27 = arith.constant 0 : index
    %c0_28 = arith.constant 0 : index
    %82 = vector.load %arg6[%c0_27, %c0_28] : memref<8x128xf32, #tpu.memory_space<vmem>>, vector<8x128xf32>
    tpu.vector_store %arg6[%c0_27, %c0_28], %81 {strides = array<i32>} : memref<8x128xf32, #tpu.memory_space<vmem>>, vector<8x128xf32>,
    return
  }
  func.func @transform_0(%arg0: i32, %arg1: i32) -> (i32, i32, i32) {
    %c0_i32 = arith.constant 0 : i32
    %c0_i32_0 = arith.constant 0 : i32
    return %arg1, %arg0, %c0_i32 : i32, i32, i32
  }
  func.func @transform_1(%arg0: i32, %arg1: i32) -> (i32, i32) {
    %c0_i32 = arith.constant 0 : i32
    %c0_i32_0 = arith.constant 0 : i32
    %c0_i32_1 = arith.constant 0 : i32
    return %c0_i32, %c0_i32_0 : i32, i32
  }
  func.func @transform_2(%arg0: i32, %arg1: i32) -> (i32, i32) {
    %c0_i32 = arith.constant 0 : i32
    %c0_i32_0 = arith.constant 0 : i32
    return %arg1, %c0_i32 : i32, i32
  }
  func.func @transform_3(%arg0: i32, %arg1: i32) -> (i32, i32) {
    %c0_i32 = arith.constant 0 : i32
    %c0_i32_0 = arith.constant 0 : i32
    %c0_i32_1 = arith.constant 0 : i32
    return %c0_i32, %c0_i32_0 : i32, i32
  }
  func.func @transform_4(%arg0: i32, %arg1: i32) -> (i32, i32) {
    %c0_i32 = arith.constant 0 : i32
    %c0_i32_0 = arith.constant 0 : i32
    return %arg0, %c0_i32 : i32, i32
  }
}

</mosaic_0001>

<llo_original>
// kernel: naive_clf_forward.1
$region0: #{naive_clf_forward.1}
  #allocation0 [shape = 'u32[]', space=smem, size = 0x4, offset = 0x4, fixed_abs, tag = 'smem constant byte address 0x4 - core index']
  #allocation1 [shape = 'u32[144,128]{1,0:T(1,128)}', space=vmem, size = 0x12000, scoped, tag = 'internal scratch']
  #allocation2 [shape = 'bf16[8,128]{1,0:T(8,128)(2,1)}', space=vmem, size = 0x800, scoped, tag = 'scratch operand']
  %s0 = inlined_call_operand.vmem [shape: s32[1,8,8], index: 0, kind: input, shape index: {}]
  %s1 = inlined_call_operand.vmem [shape: bf16[32,16], index: 1, kind: input, shape index: {}]
  %s2 = inlined_call_operand.hbm [shape: bf16[128,128], index: 2, kind: input, shape index: {}]
  %s3 = inlined_call_operand.vmem [shape: f32[1,128], index: 3, kind: input, shape index: {}]
  %s4 = inlined_call_operand.vmem [shape: f32[8,128], index: 4, kind: output, shape index: {}]
  %s5 = sld [smem:[#allocation0]]
  $region30: #{naive_clf_forward.1} parent=0
    _
  %s7 = ssub.s32 1, %s5
  %s8 = scalar_select 0, %s7, %s5
  $region1: #{naive_clf_forward.1} parent=0
    #allocation3 [shape = 'u8[32768]{0}', space=vmem, size = 0x8000, scoped, tag = 'input window, operand 2, single buffered']
    #allocation4 [shape = 's32[1]{0}', space=sflag, size = 0x4, scoped, tag = 'scoped memory for naive_clf_forward.1']
    %9 = vsyncpa [#allocation4], 0
    // Predicated region
    $region2: #{naive_clf_forward.1} parent=1 // pred_check
      _
    $region3: #{naive_clf_forward.1} parent=1 // pred_check_branch
      %11 = sbr.rel (0) target = $region5
    $region4: #{naive_clf_forward.1} parent=1 // pred_region
      _
    $region5: #{naive_clf_forward.1} parent=1 // pred_fallthru
      _
    // Predicated region
    $region6: #{naive_clf_forward.1} parent=1 // pred_check
      _
    $region7: #{naive_clf_forward.1} parent=1 // pred_check_branch
      %13 = sbr.rel (0) target = $region9
    $region8: #{naive_clf_forward.1} parent=1 // pred_region
      _
    $region9: #{naive_clf_forward.1} parent=1 // pred_fallthru
      _
    // Predicated region
    $region10: #{naive_clf_forward.1} parent=1 // pred_check
      _
    $region11: #{naive_clf_forward.1} parent=1 // pred_check_branch
      %15 = sbr.rel (0) target = $region13
    $region12: #{naive_clf_forward.1} parent=1 // pred_region
      %s17 = ssub.s32 1024, 1024
      %18 = vsyncadd [#allocation4], %s17
      %s19 = sshll.u32 [#allocation3], 4
      %s20 = int_to_ptr.vmem [resolvable:$true] %s19
      %25 = dma.hbm_to_vmem [thread:$0]  %s2, 1024, %s20, [#allocation4], 64, 64, 4
    $region13: #{naive_clf_forward.1} parent=1 // pred_fallthru
      _
    // Predicated region
    $region14: #{naive_clf_forward.1} parent=1 // pred_check
      _
    $region15: #{naive_clf_forward.1} parent=1 // pred_check_branch
      %27 = sbr.rel (0) target = $region17
    $region16: #{naive_clf_forward.1} parent=1 // pred_region
      _
    $region17: #{naive_clf_forward.1} parent=1 // pred_fallthru
      _
    // Predicated region
    $region18: #{naive_clf_forward.1} parent=1 // pred_check
      _
    $region19: #{naive_clf_forward.1} parent=1 // pred_check_branch
      %29 = sbr.rel (0) target = $region21
    $region20: #{naive_clf_forward.1} parent=1 // pred_region
      %30 = dma.done [#allocation4], 1024
    $region21: #{naive_clf_forward.1} parent=1 // pred_fallthru
      _
    %v32 = vld [vmem:[%s1] sm:$0xf]
    %v33 = vld [vmem:[%s1 + $0x4] sm:$0xf]
    %v34 = vld [vmem:[%s1 + $0x8] sm:$0xf]
    %v35 = vld [vmem:[%s1 + $0xc] sm:$0xf]
    %v36 = vld [vmem:[%s0] sm:$0xff]
    %v37 = vlaneseq
    %v38 = vand.u32 %v37, 127
    %39 = vset.pattern.permute.xlu0 0
    %40 = vperm.xlu0 %39, %v36
    %v41 = vpop.permute.xlu0 %40
    %vm42 = vcmp.eq.s32.totalorder %v41, %v38
    %v43 = vsel %vm42, 1, 0
    %v44 = vcvt.s32.f32 %v43
    %v45 = vpack.c.bf16 %v44, %v44
    %v50 = vunpack.c.l.b16 %v32
    %v51 = vunpack.c.l.b16 %v33
    %v52 = vunpack.c.l.b16 %v34
    %v53 = vunpack.c.l.b16 %v35
    %v54 = vpack.c.b16 %v51, %v50
    %v55 = vpack.c.b16 %v53, %v52
    %vm58 = vcmask 261120
    %v60 = vsel %vm58, %v45, 0
    %62 = vmatprep.subr.bf16.mxu0 0
    %63 = vmatpush1.bf16.msra.mxu0 0
    %64 = vmatprep.subr.bf16.mxu0 0
    %65 = vmatpush1.bf16.msra.mxu0 0
    %66 = vmatprep.subr.bf16.mxu0 0
    %67 = vmatpush1.bf16.msra.mxu0 0
    %68 = vmatprep.subr.bf16.mxu0 0
    %69 = vmatpush1.bf16.msra.mxu0 0
    %70 = vmatprep.subr.bf16.mxu0 0
    %71 = vmatpush1.bf16.msra.mxu0 0
    %72 = vmatprep.subr.bf16.mxu0 0
    %73 = vmatpush1.bf16.msra.mxu0 0
    %74 = vmatprep.subr.bf16.mxu0 0
    %75 = vmatpush1.bf16.msra.mxu0 %v55
    %76 = vmatprep.subr.bf16.mxu0 0
    %77 = vmatpush1.bf16.msra.mxu0 %v54
    %78 = vmatprep.subr.bf16.mxu0 0
    %79 = vmatpush2.bf16.msra.mxu0 0
    %80 = vmatprep.subr.bf16.mxu0 0
    %81 = vmatpush2.bf16.msra.mxu0 0
    %82 = vmatprep.subr.bf16.mxu0 0
    %83 = vmatpush2.bf16.msra.mxu0 0
    %84 = vmatprep.subr.bf16.mxu0 0
    %85 = vmatpush2.bf16.msra.mxu0 0
    %86 = vmatprep.subr.bf16.mxu0 0
    %87 = vmatpush2.bf16.msra.mxu0 0
    %88 = vmatprep.subr.bf16.mxu0 0
    %89 = vmatpush2.bf16.msra.mxu0 0
    %90 = vmatprep.subr.bf16.mxu0 0
    %91 = vmatpush2.bf16.msra.mxu0 0
    %92 = vmatprep.subr.bf16.mxu0 0
    %93 = vmatpush2.bf16.msra.mxu0 0
    %94 = vmatprep.mubr.bf16.mxu0 0
    %95 = vmatmul.mubr.bf16.gmra.mxu0 %v60
    %v96 = vpop.f32.mrf.mxu0
    %v97 = vadd.f32 0.0, %v96
    %v98 = vpop.f32.mrf.mxu0
    %v99 = vpop.f32.mrf.mxu0
    %v100 = vpop.f32.mrf.mxu0
    %101 = vdwg.mxu0
    %v102 = vpack.c.bf16 %v97, %v97
    %vm103 = vcmask 125952
    %104 = vst.msk [vmem:[#allocation2] sm:$0xf] %vm103, %v102
    %105 = vset.pattern.permute.xlu0 1
    %106 = vperm.xlu0 %105, %v36
    %v107 = vpop.permute.xlu0 %106
    %vm108 = vcmp.eq.s32.totalorder %v107, %v38
    %v109 = vsel %vm108, 1, 0
    %v110 = vcvt.s32.f32 %v109
    %v111 = vpack.c.bf16 %v110, %v110
    %v113 = vsel %vm58, %v111, 0
    %115 = vmatprep.subr.bf16.mxu0 0
    %116 = vmatpush1.bf16.msra.mxu0 0
    %117 = vmatprep.subr.bf16.mxu0 0
    %118 = vmatpush1.bf16.msra.mxu0 0
    %119 = vmatprep.subr.bf16.mxu0 0
    %120 = vmatpush1.bf16.msra.mxu0 0
    %121 = vmatprep.subr.bf16.mxu0 0
    %122 = vmatpush1.bf16.msra.mxu0 0
    %123 = vmatprep.subr.bf16.mxu0 0
    %124 = vmatpush1.bf16.msra.mxu0 0
    %125 = vmatprep.subr.bf16.mxu0 0
    %126 = vmatpush1.bf16.msra.mxu0 0
    %127 = vmatprep.subr.bf16.mxu0 0
    %128 = vmatpush1.bf16.msra.mxu0 %v55
    %129 = vmatprep.subr.bf16.mxu0 0
    %130 = vmatpush1.bf16.msra.mxu0 %v54
    %131 = vmatprep.subr.bf16.mxu0 0
    %132 = vmatpush2.bf16.msra.mxu0 0
    %133 = vmatprep.subr.bf16.mxu0 0
    %134 = vmatpush2.bf16.msra.mxu0 0
    %135 = vmatprep.subr.bf16.mxu0 0
    %136 = vmatpush2.bf16.msra.mxu0 0
    %137 = vmatprep.subr.bf16.mxu0 0
    %138 = vmatpush2.bf16.msra.mxu0 0
    %139 = vmatprep.subr.bf16.mxu0 0
    %140 = vmatpush2.bf16.msra.mxu0 0
    %141 = vmatprep.subr.bf16.mxu0 0
    %142 = vmatpush2.bf16.msra.mxu0 0
    %143 = vmatprep.subr.bf16.mxu0 0
    %144 = vmatpush2.bf16.msra.mxu0 0
    %145 = vmatprep.subr.bf16.mxu0 0
    %146 = vmatpush2.bf16.msra.mxu0 0
    %147 = vmatprep.mubr.bf16.mxu0 0
    %148 = vmatmul.mubr.bf16.gmra.mxu0 %v113
    %v149 = vpop.f32.mrf.mxu0
    %v150 = vadd.f32 0.0, %v149
    %v151 = vpop.f32.mrf.mxu0
    %v152 = vpop.f32.mrf.mxu0
    %v153 = vpop.f32.mrf.mxu0
    %154 = vdwg.mxu0
    %v155 = vpack.c.bf16 %v150, %v150
    %v157 = vunpack.c.l.b16 %v155
    %v158 = vpack.c.b16 %v157, %v157
    %159 = vrot.lane.b32.xlu0 %v158, 16
    %v160 = vpop.permute.xlu0 %159
    %vm162 = vcmask 257152
    %163 = vst.msk [vmem:[#allocation2] sm:$0xf] %vm162, %v160
    %164 = vset.pattern.permute.xlu0 2
    %165 = vperm.xlu0 %164, %v36
    %v166 = vpop.permute.xlu0 %165
    %vm167 = vcmp.eq.s32.totalorder %v166, %v38
    %v168 = vsel %vm167, 1, 0
    %v169 = vcvt.s32.f32 %v168
    %v170 = vpack.c.bf16 %v169, %v169
    %v172 = vsel %vm58, %v170, 0
    %174 = vmatprep.subr.bf16.mxu0 0
    %175 = vmatpush1.bf16.msra.mxu0 0
    %176 = vmatprep.subr.bf16.mxu0 0
    %177 = vmatpush1.bf16.msra.mxu0 0
    %178 = vmatprep.subr.bf16.mxu0 0
    %179 = vmatpush1.bf16.msra.mxu0 0
    %180 = vmatprep.subr.bf16.mxu0 0
    %181 = vmatpush1.bf16.msra.mxu0 0
    %182 = vmatprep.subr.bf16.mxu0 0
    %183 = vmatpush1.bf16.msra.mxu0 0
    %184 = vmatprep.subr.bf16.mxu0 0
    %185 = vmatpush1.bf16.msra.mxu0 0
    %186 = vmatprep.subr.bf16.mxu0 0
    %187 = vmatpush1.bf16.msra.mxu0 %v55
    %188 = vmatprep.subr.bf16.mxu0 0
    %189 = vmatpush1.bf16.msra.mxu0 %v54
    %190 = vmatprep.subr.bf16.mxu0 0
    %191 = vmatpush2.bf16.msra.mxu0 0
    %192 = vmatprep.subr.bf16.mxu0 0
    %193 = vmatpush2.bf16.msra.mxu0 0
    %194 = vmatprep.subr.bf16.mxu0 0
    %195 = vmatpush2.bf16.msra.mxu0 0
    %196 = vmatprep.subr.bf16.mxu0 0
    %197 = vmatpush2.bf16.msra.mxu0 0
    %198 = vmatprep.subr.bf16.mxu0 0
    %199 = vmatpush2.bf16.msra.mxu0 0
    %200 = vmatprep.subr.bf16.mxu0 0
    %201 = vmatpush2.bf16.msra.mxu0 0
    %202 = vmatprep.subr.bf16.mxu0 0
    %203 = vmatpush2.bf16.msra.mxu0 0
    %204 = vmatprep.subr.bf16.mxu0 0
    %205 = vmatpush2.bf16.msra.mxu0 0
    %206 = vmatprep.mubr.bf16.mxu0 0
    %207 = vmatmul.mubr.bf16.gmra.mxu0 %v172
    %v208 = vpop.f32.mrf.mxu0
    %v209 = vadd.f32 0.0, %v208
    %v210 = vpop.f32.mrf.mxu0
    %v211 = vpop.f32.mrf.mxu0
    %v212 = vpop.f32.mrf.mxu0
    %213 = vdwg.mxu0
    %v214 = vpack.c.bf16 %v209, %v209
    %v216 = vunpack.c.l.b16 %v214
    %v217 = vpack.c.b16 %v216, %v216
    %218 = vrot.lane.b32.xlu0 %v217, 32
    %v219 = vpop.permute.xlu0 %218
    %vm221 = vcmask 388352
    %222 = vst.msk [vmem:[#allocation2] sm:$0xf] %vm221, %v219
    %223 = vset.pattern.permute.xlu0 3
    %224 = vperm.xlu0 %223, %v36
    %v225 = vpop.permute.xlu0 %224
    %vm226 = vcmp.eq.s32.totalorder %v225, %v38
    %v227 = vsel %vm226, 1, 0
    %v228 = vcvt.s32.f32 %v227
    %v229 = vpack.c.bf16 %v228, %v228
    %v231 = vsel %vm58, %v229, 0
    %233 = vmatprep.subr.bf16.mxu0 0
    %234 = vmatpush1.bf16.msra.mxu0 0
    %235 = vmatprep.subr.bf16.mxu0 0
    %236 = vmatpush1.bf16.msra.mxu0 0
    %237 = vmatprep.subr.bf16.mxu0 0
    %238 = vmatpush1.bf16.msra.mxu0 0
    %239 = vmatprep.subr.bf16.mxu0 0
    %240 = vmatpush1.bf16.msra.mxu0 0
    %241 = vmatprep.subr.bf16.mxu0 0
    %242 = vmatpush1.bf16.msra.mxu0 0
    %243 = vmatprep.subr.bf16.mxu0 0
    %244 = vmatpush1.bf16.msra.mxu0 0
    %245 = vmatprep.subr.bf16.mxu0 0
    %246 = vmatpush1.bf16.msra.mxu0 %v55
    %247 = vmatprep.subr.bf16.mxu0 0
    %248 = vmatpush1.bf16.msra.mxu0 %v54
    %249 = vmatprep.subr.bf16.mxu0 0
    %250 = vmatpush2.bf16.msra.mxu0 0
    %251 = vmatprep.subr.bf16.mxu0 0
    %252 = vmatpush2.bf16.msra.mxu0 0
    %253 = vmatprep.subr.bf16.mxu0 0
    %254 = vmatpush2.bf16.msra.mxu0 0
    %255 = vmatprep.subr.bf16.mxu0 0
    %256 = vmatpush2.bf16.msra.mxu0 0
    %257 = vmatprep.subr.bf16.mxu0 0
    %258 = vmatpush2.bf16.msra.mxu0 0
    %259 = vmatprep.subr.bf16.mxu0 0
    %260 = vmatpush2.bf16.msra.mxu0 0
    %261 = vmatprep.subr.bf16.mxu0 0
    %262 = vmatpush2.bf16.msra.mxu0 0
    %263 = vmatprep.subr.bf16.mxu0 0
    %264 = vmatpush2.bf16.msra.mxu0 0
    %265 = vmatprep.mubr.bf16.mxu0 0
    %266 = vmatmul.mubr.bf16.gmra.mxu0 %v231
    %v267 = vpop.f32.mrf.mxu0
    %v268 = vadd.f32 0.0, %v267
    %v269 = vpop.f32.mrf.mxu0
    %v270 = vpop.f32.mrf.mxu0
    %v271 = vpop.f32.mrf.mxu0
    %272 = vdwg.mxu0
    %v273 = vpack.c.bf16 %v268, %v268
    %v275 = vunpack.c.l.b16 %v273
    %v276 = vpack.c.b16 %v275, %v275
    %277 = vrot.lane.b32.xlu0 %v276, 48
    %v278 = vpop.permute.xlu0 %277
    %vm280 = vcmask 519552
    %281 = vst.msk [vmem:[#allocation2] sm:$0xf] %vm280, %v278
    %282 = vset.pattern.permute.xlu0 4
    %283 = vperm.xlu0 %282, %v36
    %v284 = vpop.permute.xlu0 %283
    %vm285 = vcmp.eq.s32.totalorder %v284, %v38
    %v286 = vsel %vm285, 1, 0
    %v287 = vcvt.s32.f32 %v286
    %v288 = vpack.c.bf16 %v287, %v287
    %v290 = vsel %vm58, %v288, 0
    %292 = vmatprep.subr.bf16.mxu0 0
    %293 = vmatpush1.bf16.msra.mxu0 0
    %294 = vmatprep.subr.bf16.mxu0 0
    %295 = vmatpush1.bf16.msra.mxu0 0
    %296 = vmatprep.subr.bf16.mxu0 0
    %297 = vmatpush1.bf16.msra.mxu0 0
    %298 = vmatprep.subr.bf16.mxu0 0
    %299 = vmatpush1.bf16.msra.mxu0 0
    %300 = vmatprep.subr.bf16.mxu0 0
    %301 = vmatpush1.bf16.msra.mxu0 0
    %302 = vmatprep.subr.bf16.mxu0 0
    %303 = vmatpush1.bf16.msra.mxu0 0
    %304 = vmatprep.subr.bf16.mxu0 0
    %305 = vmatpush1.bf16.msra.mxu0 %v55
    %306 = vmatprep.subr.bf16.mxu0 0
    %307 = vmatpush1.bf16.msra.mxu0 %v54
    %308 = vmatprep.subr.bf16.mxu0 0
    %309 = vmatpush2.bf16.msra.mxu0 0
    %310 = vmatprep.subr.bf16.mxu0 0
    %311 = vmatpush2.bf16.msra.mxu0 0
    %312 = vmatprep.subr.bf16.mxu0 0
    %313 = vmatpush2.bf16.msra.mxu0 0
    %314 = vmatprep.subr.bf16.mxu0 0
    %315 = vmatpush2.bf16.msra.mxu0 0
    %316 = vmatprep.subr.bf16.mxu0 0
    %317 = vmatpush2.bf16.msra.mxu0 0
    %318 = vmatprep.subr.bf16.mxu0 0
    %319 = vmatpush2.bf16.msra.mxu0 0
    %320 = vmatprep.subr.bf16.mxu0 0
    %321 = vmatpush2.bf16.msra.mxu0 0
    %322 = vmatprep.subr.bf16.mxu0 0
    %323 = vmatpush2.bf16.msra.mxu0 0
    %324 = vmatprep.mubr.bf16.mxu0 0
    %325 = vmatmul.mubr.bf16.gmra.mxu0 %v290
    %v326 = vpop.f32.mrf.mxu0
    %v327 = vadd.f32 0.0, %v326
    %v328 = vpop.f32.mrf.mxu0
    %v329 = vpop.f32.mrf.mxu0
    %v330 = vpop.f32.mrf.mxu0
    %331 = vdwg.mxu0
    %v332 = vpack.c.bf16 %v327, %v327
    %v334 = vunpack.c.l.b16 %v332
    %v335 = vpack.c.b16 %v334, %v334
    %336 = vrot.lane.b32.xlu0 %v335, 64
    %v337 = vpop.permute.xlu0 %336
    %vm339 = vcmask 650752
    %340 = vst.msk [vmem:[#allocation2] sm:$0xf] %vm339, %v337
    %341 = vset.pattern.permute.xlu0 5
    %342 = vperm.xlu0 %341, %v36
    %v343 = vpop.permute.xlu0 %342
    %vm344 = vcmp.eq.s32.totalorder %v343, %v38
    %v345 = vsel %vm344, 1, 0
    %v346 = vcvt.s32.f32 %v345
    %v347 = vpack.c.bf16 %v346, %v346
    %v349 = vsel %vm58, %v347, 0
    %351 = vmatprep.subr.bf16.mxu0 0
    %352 = vmatpush1.bf16.msra.mxu0 0
    %353 = vmatprep.subr.bf16.mxu0 0
    %354 = vmatpush1.bf16.msra.mxu0 0
    %355 = vmatprep.subr.bf16.mxu0 0
    %356 = vmatpush1.bf16.msra.mxu0 0
    %357 = vmatprep.subr.bf16.mxu0 0
    %358 = vmatpush1.bf16.msra.mxu0 0
    %359 = vmatprep.subr.bf16.mxu0 0
    %360 = vmatpush1.bf16.msra.mxu0 0
    %361 = vmatprep.subr.bf16.mxu0 0
    %362 = vmatpush1.bf16.msra.mxu0 0
    %363 = vmatprep.subr.bf16.mxu0 0
    %364 = vmatpush1.bf16.msra.mxu0 %v55
    %365 = vmatprep.subr.bf16.mxu0 0
    %366 = vmatpush1.bf16.msra.mxu0 %v54
    %367 = vmatprep.subr.bf16.mxu0 0
    %368 = vmatpush2.bf16.msra.mxu0 0
    %369 = vmatprep.subr.bf16.mxu0 0
    %370 = vmatpush2.bf16.msra.mxu0 0
    %371 = vmatprep.subr.bf16.mxu0 0
    %372 = vmatpush2.bf16.msra.mxu0 0
    %373 = vmatprep.subr.bf16.mxu0 0
    %374 = vmatpush2.bf16.msra.mxu0 0
    %375 = vmatprep.subr.bf16.mxu0 0
    %376 = vmatpush2.bf16.msra.mxu0 0
    %377 = vmatprep.subr.bf16.mxu0 0
    %378 = vmatpush2.bf16.msra.mxu0 0
    %379 = vmatprep.subr.bf16.mxu0 0
    %380 = vmatpush2.bf16.msra.mxu0 0
    %381 = vmatprep.subr.bf16.mxu0 0
    %382 = vmatpush2.bf16.msra.mxu0 0
    %383 = vmatprep.mubr.bf16.mxu0 0
    %384 = vmatmul.mubr.bf16.gmra.mxu0 %v349
    %v385 = vpop.f32.mrf.mxu0
    %v386 = vadd.f32 0.0, %v385
    %v387 = vpop.f32.mrf.mxu0
    %v388 = vpop.f32.mrf.mxu0
    %v389 = vpop.f32.mrf.mxu0
    %390 = vdwg.mxu0
    %v391 = vpack.c.bf16 %v386, %v386
    %v393 = vunpack.c.l.b16 %v391
    %v394 = vpack.c.b16 %v393, %v393
    %395 = vrot.lane.b32.xlu0 %v394, 80
    %v396 = vpop.permute.xlu0 %395
    %vm398 = vcmask 781952
    %399 = vst.msk [vmem:[#allocation2] sm:$0xf] %vm398, %v396
    %400 = vset.pattern.permute.xlu0 6
    %401 = vperm.xlu0 %400, %v36
    %v402 = vpop.permute.xlu0 %401
    %vm403 = vcmp.eq.s32.totalorder %v402, %v38
    %v404 = vsel %vm403, 1, 0
    %v405 = vcvt.s32.f32 %v404
    %v406 = vpack.c.bf16 %v405, %v405
    %v408 = vsel %vm58, %v406, 0
    %410 = vmatprep.subr.bf16.mxu0 0
    %411 = vmatpush1.bf16.msra.mxu0 0
    %412 = vmatprep.subr.bf16.mxu0 0
    %413 = vmatpush1.bf16.msra.mxu0 0
    %414 = vmatprep.subr.bf16.mxu0 0
    %415 = vmatpush1.bf16.msra.mxu0 0
    %416 = vmatprep.subr.bf16.mxu0 0
    %417 = vmatpush1.bf16.msra.mxu0 0
    %418 = vmatprep.subr.bf16.mxu0 0
    %419 = vmatpush1.bf16.msra.mxu0 0
    %420 = vmatprep.subr.bf16.mxu0 0
    %421 = vmatpush1.bf16.msra.mxu0 0
    %422 = vmatprep.subr.bf16.mxu0 0
    %423 = vmatpush1.bf16.msra.mxu0 %v55
    %424 = vmatprep.subr.bf16.mxu0 0
    %425 = vmatpush1.bf16.msra.mxu0 %v54
    %426 = vmatprep.subr.bf16.mxu0 0
    %427 = vmatpush2.bf16.msra.mxu0 0
    %428 = vmatprep.subr.bf16.mxu0 0
    %429 = vmatpush2.bf16.msra.mxu0 0
    %430 = vmatprep.subr.bf16.mxu0 0
    %431 = vmatpush2.bf16.msra.mxu0 0
    %432 = vmatprep.subr.bf16.mxu0 0
    %433 = vmatpush2.bf16.msra.mxu0 0
    %434 = vmatprep.subr.bf16.mxu0 0
    %435 = vmatpush2.bf16.msra.mxu0 0
    %436 = vmatprep.subr.bf16.mxu0 0
    %437 = vmatpush2.bf16.msra.mxu0 0
    %438 = vmatprep.subr.bf16.mxu0 0
    %439 = vmatpush2.bf16.msra.mxu0 0
    %440 = vmatprep.subr.bf16.mxu0 0
    %441 = vmatpush2.bf16.msra.mxu0 0
    %442 = vmatprep.mubr.bf16.mxu0 0
    %443 = vmatmul.mubr.bf16.gmra.mxu0 %v408
    %v444 = vpop.f32.mrf.mxu0
    %v445 = vadd.f32 0.0, %v444
    %v446 = vpop.f32.mrf.mxu0
    %v447 = vpop.f32.mrf.mxu0
    %v448 = vpop.f32.mrf.mxu0
    %449 = vdwg.mxu0
    %v450 = vpack.c.bf16 %v445, %v445
    %v452 = vunpack.c.l.b16 %v450
    %v453 = vpack.c.b16 %v452, %v452
    %454 = vrot.lane.b32.xlu0 %v453, 96
    %v455 = vpop.permute.xlu0 %454
    %vm457 = vcmask 913152
    %458 = vst.msk [vmem:[#allocation2] sm:$0xf] %vm457, %v455
    %459 = vset.pattern.permute.xlu0 7
    %460 = vperm.xlu0 %459, %v36
    %v461 = vpop.permute.xlu0 %460
    %vm462 = vcmp.eq.s32.totalorder %v461, %v38
    %v463 = vsel %vm462, 1, 0
    %v464 = vcvt.s32.f32 %v463
    %v465 = vpack.c.bf16 %v464, %v464
    %v467 = vsel %vm58, %v465, 0
    %469 = vmatprep.subr.bf16.mxu0 0
    %470 = vmatpush1.bf16.msra.mxu0 0
    %471 = vmatprep.subr.bf16.mxu0 0
    %472 = vmatpush1.bf16.msra.mxu0 0
    %473 = vmatprep.subr.bf16.mxu0 0
    %474 = vmatpush1.bf16.msra.mxu0 0
    %475 = vmatprep.subr.bf16.mxu0 0
    %476 = vmatpush1.bf16.msra.mxu0 0
    %477 = vmatprep.subr.bf16.mxu0 0
    %478 = vmatpush1.bf16.msra.mxu0 0
    %479 = vmatprep.subr.bf16.mxu0 0
    %480 = vmatpush1.bf16.msra.mxu0 0
    %481 = vmatprep.subr.bf16.mxu0 0
    %482 = vmatpush1.bf16.msra.mxu0 %v55
    %483 = vmatprep.subr.bf16.mxu0 0
    %484 = vmatpush1.bf16.msra.mxu0 %v54
    %485 = vmatprep.subr.bf16.mxu0 0
    %486 = vmatpush2.bf16.msra.mxu0 0
    %487 = vmatprep.subr.bf16.mxu0 0
    %488 = vmatpush2.bf16.msra.mxu0 0
    %489 = vmatprep.subr.bf16.mxu0 0
    %490 = vmatpush2.bf16.msra.mxu0 0
    %491 = vmatprep.subr.bf16.mxu0 0
    %492 = vmatpush2.bf16.msra.mxu0 0
    %493 = vmatprep.subr.bf16.mxu0 0
    %494 = vmatpush2.bf16.msra.mxu0 0
    %495 = vmatprep.subr.bf16.mxu0 0
    %496 = vmatpush2.bf16.msra.mxu0 0
    %497 = vmatprep.subr.bf16.mxu0 0
    %498 = vmatpush2.bf16.msra.mxu0 0
    %499 = vmatprep.subr.bf16.mxu0 0
    %500 = vmatpush2.bf16.msra.mxu0 0
    %501 = vmatprep.mubr.bf16.mxu0 0
    %502 = vmatmul.mubr.bf16.gmra.mxu0 %v467
    %v503 = vpop.f32.mrf.mxu0
    %v504 = vadd.f32 0.0, %v503
    %v505 = vpop.f32.mrf.mxu0
    %v506 = vpop.f32.mrf.mxu0
    %v507 = vpop.f32.mrf.mxu0
    %508 = vdwg.mxu0
    %v509 = vpack.c.bf16 %v504, %v504
    %v511 = vunpack.c.l.b16 %v509
    %v512 = vpack.c.b16 %v511, %v511
    %513 = vrot.lane.b32.xlu0 %v512, 112
    %v514 = vpop.permute.xlu0 %513
    %vm516 = vcmask 1044352
    %517 = vst.msk [vmem:[#allocation2] sm:$0xf] %vm516, %v514
    %v518 = vld [vmem:[#allocation2] sm:$0xf]
    %v519 = vld [vmem:[#allocation3] sm:$0xf]
    %v520 = vld [vmem:[#allocation3 + $0x4] sm:$0xf]
    %v521 = vld [vmem:[#allocation3 + $0x8] sm:$0xf]
    %v522 = vld [vmem:[#allocation3 + $0xc] sm:$0xf]
    %v523 = vld [vmem:[#allocation3 + $0x10] sm:$0xf]
    %v524 = vld [vmem:[#allocation3 + $0x14] sm:$0xf]
    %v525 = vld [vmem:[#allocation3 + $0x18] sm:$0xf]
    %v526 = vld [vmem:[#allocation3 + $0x1c] sm:$0xf]
    %v527 = vld [vmem:[#allocation3 + $0x20] sm:$0xf]
    %v528 = vld [vmem:[#allocation3 + $0x24] sm:$0xf]
    %v529 = vld [vmem:[#allocation3 + $0x28] sm:$0xf]
    %v530 = vld [vmem:[#allocation3 + $0x2c] sm:$0xf]
    %v531 = vld [vmem:[#allocation3 + $0x30] sm:$0xf]
    %v532 = vld [vmem:[#allocation3 + $0x34] sm:$0xf]
    %v533 = vld [vmem:[#allocation3 + $0x38] sm:$0xf]
    %v534 = vld [vmem:[#allocation3 + $0x3c] sm:$0xf]
    %v535 = vld [vmem:[%s3] sm:$0x1]
    %v537 = vlaneseq
    %v538 = vshrl.u32 %v537, 7
    %v539 = vsub.s32 0, %v538
    %v540 = vrot.slane %v535, %v539
    %v558 = vunpack.c.l.b16 %v519
    %v559 = vunpack.c.l.b16 %v520
    %v560 = vunpack.c.l.b16 %v521
    %v561 = vunpack.c.l.b16 %v522
    %v562 = vunpack.c.l.b16 %v523
    %v563 = vunpack.c.l.b16 %v524
    %v564 = vunpack.c.l.b16 %v525
    %v565 = vunpack.c.l.b16 %v526
    %v566 = vunpack.c.l.b16 %v527
    %v567 = vunpack.c.l.b16 %v528
    %v568 = vunpack.c.l.b16 %v529
    %v569 = vunpack.c.l.b16 %v530
    %v570 = vunpack.c.l.b16 %v531
    %v571 = vunpack.c.l.b16 %v532
    %v572 = vunpack.c.l.b16 %v533
    %v573 = vunpack.c.l.b16 %v534
    %v574 = vpack.c.b16 %v559, %v558
    %v575 = vpack.c.b16 %v561, %v560
    %v576 = vpack.c.b16 %v563, %v562
    %v577 = vpack.c.b16 %v565, %v564
    %v578 = vpack.c.b16 %v567, %v566
    %v579 = vpack.c.b16 %v569, %v568
    %v580 = vpack.c.b16 %v571, %v570
    %v581 = vpack.c.b16 %v573, %v572
    %590 = vmatprep.subr.bf16.mxu0 0
    %591 = vmatpush1.bf16.msra.mxu0 %v581
    %592 = vmatprep.subr.bf16.mxu0 0
    %593 = vmatpush1.bf16.msra.mxu0 %v580
    %594 = vmatprep.subr.bf16.mxu0 0
    %595 = vmatpush1.bf16.msra.mxu0 %v579
    %596 = vmatprep.subr.bf16.mxu0 0
    %597 = vmatpush1.bf16.msra.mxu0 %v578
    %598 = vmatprep.subr.bf16.mxu0 0
    %599 = vmatpush1.bf16.msra.mxu0 %v577
    %600 = vmatprep.subr.bf16.mxu0 0
    %601 = vmatpush1.bf16.msra.mxu0 %v576
    %602 = vmatprep.subr.bf16.mxu0 0
    %603 = vmatpush1.bf16.msra.mxu0 %v575
    %604 = vmatprep.subr.bf16.mxu0 0
    %605 = vmatpush1.bf16.msra.mxu0 %v574
    %606 = vmatprep.subr.bf16.mxu0 0
    %607 = vmatpush2.bf16.msra.mxu0 0
    %608 = vmatprep.subr.bf16.mxu0 0
    %609 = vmatpush2.bf16.msra.mxu0 0
    %610 = vmatprep.subr.bf16.mxu0 0
    %611 = vmatpush2.bf16.msra.mxu0 0
    %612 = vmatprep.subr.bf16.mxu0 0
    %613 = vmatpush2.bf16.msra.mxu0 0
    %614 = vmatprep.subr.bf16.mxu0 0
    %615 = vmatpush2.bf16.msra.mxu0 0
    %616 = vmatprep.subr.bf16.mxu0 0
    %617 = vmatpush2.bf16.msra.mxu0 0
    %618 = vmatprep.subr.bf16.mxu0 0
    %619 = vmatpush2.bf16.msra.mxu0 0
    %620 = vmatprep.subr.bf16.mxu0 0
    %621 = vmatpush2.bf16.msra.mxu0 0
    %622 = vmatprep.mubr.bf16.mxu0 0
    %623 = vmatmul.mubr.bf16.gmra.mxu0 %v518
    %v624 = vpop.f32.mrf.mxu0
    %v625 = vadd.f32 %v540, %v624
    %v626 = vpop.f32.mrf.mxu0
    %v627 = vpop.f32.mrf.mxu0
    %v628 = vpop.f32.mrf.mxu0
    %629 = vdwg.mxu0
    %630 = vst [vmem:[%s4] sm:$0xff] %v625
    // Predicated region
    $region22: #{naive_clf_forward.1} parent=1 // pred_check
      _
    $region23: #{naive_clf_forward.1} parent=1 // pred_check_branch
      %632 = sbr.rel (0) target = $region25
    $region24: #{naive_clf_forward.1} parent=1 // pred_region
      _
    $region25: #{naive_clf_forward.1} parent=1 // pred_fallthru
      _
    // Predicated region
    $region26: #{naive_clf_forward.1} parent=1 // pred_check
      _
    $region27: #{naive_clf_forward.1} parent=1 // pred_check_branch
      %634 = sbr.rel (0) target = $region29
    $region28: #{naive_clf_forward.1} parent=1 // pred_region
      _
    $region29: #{naive_clf_forward.1} parent=1 // pred_fallthru
      _
    %635 = vsyncpa [#allocation4], 1

</llo_original>
